<compile_context>
chip_gen: v6e
topology: v6e:2x2x1
jax: 0.10.0
libtpu: 0.0.40
codegen_flags: <defaults>
</compile_context>

<pallas_src>
from functools import partial

import jax
import jax.numpy as jnp
import numpy as np
from jax.experimental import pallas as pl
from jax.experimental.pallas import tpu as pltpu

LANE = 128


def _round_up(x, m):
    return ((x + m - 1) // m) * m


def aggregation_kernel(max_nodes, f_in, h_ref, inv_ref, w0_ref, b0_ref, w1_ref,
                       b1_ref, o_ref):
    # --- segment sum over the MAX_N node slots of the flat [TG, MAX_N*F_in]
    #     tile.  Accumulate a small f32 [TG, F_in] value from static lane
    #     slices of the ref; this avoids materializing an f32 copy of the
    #     whole streamed tile (VPU/XLU slots have ample slack here).
    if max_nodes <= 64:
        hsum = h_ref[:, 0:f_in].astype(jnp.float32)
        for n in range(1, max_nodes):
            hsum = hsum + h_ref[:, n * f_in:(n + 1) * f_in].astype(jnp.float32)
    else:
        # TODO(synk): for very large MAX_N move the node reduction onto a grid
        # axis instead of this in-VMEM reshape.
        x = h_ref[...]
        hsum = jnp.sum(x.reshape(x.shape[0], max_nodes, f_in), axis=1,
                       dtype=jnp.float32)

    # --- layer 0: (sum @ W0) * (1/count) + B0, tanh.  The per-row scale
    #     commutes with the matmul, so the smaller [TG, F_in] result is scaled
    #     instead of dividing the streamed features.
    w_dtype = w0_ref.dtype          # bf16 weights -> MXU fast path on v6e/v7x
    z = jnp.dot(hsum.astype(w_dtype), w0_ref[...],
                preferred_element_type=jnp.float32)
    z = jnp.tanh(z * inv_ref[...] + b0_ref[...])

    # --- layer 1: z @ W1 + B1.
    out = jnp.dot(z.astype(w_dtype), w1_ref[...],
                  preferred_element_type=jnp.float32) + b1_ref[...]
    o_ref[...] = out.astype(o_ref.dtype)


def _device_caps():
    """Per-generation tile cap / VMEM limits (conservative when unknown)."""
    try:
        kind = jax.devices()[0].device_kind.lower()
    except Exception:  # pragma: no cover - defensive
        kind = ""
    if "v7" in kind:
        # 64 MiB physical VMEM per TensorCore: keep headroom under the limit.
        return dict(tg_cap=512, vmem_limit=48 << 20, vmem_budget=32 << 20)
    if "v5" in kind or "v6" in kind:
        # 128 MiB physical VMEM: larger tiles amortize per-step overhead.
        return dict(tg_cap=1024, vmem_limit=64 << 20, vmem_budget=48 << 20)
    return dict(tg_cap=512, vmem_limit=None, vmem_budget=16 << 20)


def _choose_tiling(G, flat, in_itemsize, f_in, f_out, out_itemsize,
                   tg_cap, vmem_budget, min_tiles=2):
    """Pick (TG, ntiles, G_pad).

    Accounts for the double-buffered streamed tiles, the VMEM-resident
    parameter buffers (x2 pipeline buffers each) and the f32 intermediates;
    prefers a TG that divides G exactly (zero-copy: no graph-axis pad) when
    that costs at most ~2x the ideal grid-step count; prefers >=2 grid steps
    so the "parallel" axis can use both TensorCores on v7x.
    """
    # VMEM per streamed graph row (double-buffered) + f32 intermediates.
    row_bytes = (2 * flat * in_itemsize                        # h tile x2 bufs
                 + 2 * LANE * 4                                # inv tile x2 bufs
                 + 2 * _round_up(f_out, LANE) * out_itemsize   # out tile x2 bufs
                 + (2 * _round_up(f_in, LANE) + _round_up(f_out, LANE)) * 4)
    # VMEM-resident parameters (2 pipeline buffers each, lane/sublane padded).
    param_bytes = 2 * 4 * (_round_up(f_in, 8) * _round_up(f_in, LANE)
                           + _round_up(f_in, 8) * _round_up(f_out, LANE)
                           + 8 * _round_up(f_in, LANE)
                           + 8 * _round_up(f_out, LANE))
    avail = max(vmem_budget - param_bytes, 8 * row_bytes)
    tg_max = max(8, (min(tg_cap, avail // row_bytes) // 8) * 8)

    min_tiles = min_tiles if G >= 16 else 1
    ntiles = max(min_tiles, pl.cdiv(G, tg_max))

    # Zero-copy path: an exact divisor TG (multiple of 8) within 2x of ideal.
    if G % 8 == 0:
        for nt in range(ntiles, 2 * ntiles + 1):
            if (G // 8) % nt == 0 and G // nt <= tg_max:
                return G // nt, nt, G
    tg = _round_up(pl.cdiv(G, ntiles), 8)
    return tg, ntiles, ntiles * tg


def aggregation_forward(h_flat, counts, W0, B0, W1, B1, *, max_nodes):
    """Forward pass of `Aggregation` (dgl.mean_nodes path).

    h_flat : [G, max_nodes * F_in] per-graph node features, flattened along
             the lane axis and zero-padded to `max_nodes` node slots.  Keep
             max_nodes * F_in a multiple of 128 (lane-dense) and use bf16 for
             the cheapest HBM stream.
    counts : [G] or [G, 1] number of real nodes per graph.
    """
    G = h_flat.shape[0]
    f_in = W0.shape[0]
    f_out = W1.shape[1]
    flat = max_nodes * f_in
    assert h_flat.shape == (G, flat), (h_flat.shape, (G, flat))

    out_dtype = h_flat.dtype
    caps = _device_caps()
    tg, ntiles, g_pad = _choose_tiling(
        G, flat, jnp.dtype(h_flat.dtype).itemsize, f_in, f_out,
        jnp.dtype(out_dtype).itemsize, caps["tg_cap"], caps["vmem_budget"])

    # 1/count (0 for empty graphs -> zero mean, like dgl.mean_nodes).
    counts_f = jnp.asarray(counts, jnp.float32).reshape(G)
    inv = jnp.where(counts_f > 0, 1.0 / jnp.maximum(counts_f, 1.0), 0.0)
    inv_p = jnp.zeros((g_pad, 1), jnp.float32).at[:G, 0].set(inv)

    # Graph-axis padding only when TG does not divide G exactly -- the single
    # copy of h this wrapper may ever make.  Callers with friendly G hit the
    # zero-copy path chosen by _choose_tiling.
    if g_pad != G:
        h_in = jnp.zeros((g_pad, flat), h_flat.dtype).at[:G, :].set(h_flat)
    else:
        h_in = h_flat

    w0 = jnp.asarray(W0)
    w1 = jnp.asarray(W1)
    b0 = jnp.asarray(B0, jnp.float32).reshape(1, f_in)
    b1 = jnp.asarray(B1, jnp.float32).reshape(1, f_out)

    compiler_kwargs = dict(dimension_semantics=("parallel",))
    if caps["vmem_limit"] is not None:
        compiler_kwargs["vmem_limit_bytes"] = caps["vmem_limit"]

    out_p = pl.pallas_call(
        partial(aggregation_kernel, max_nodes, f_in),
        out_shape=jax.ShapeDtypeStruct((g_pad, f_out), out_dtype),
        grid=(ntiles,),
        in_specs=[
            # streamed per-tile inputs (double-buffered by the pipeline)
            pl.BlockSpec((tg, flat), lambda i: (i, 0)),
            pl.BlockSpec((tg, 1), lambda i: (i, 0)),
            # parameters: constant index_map -> fetched once, VMEM-resident
            pl.BlockSpec((f_in, f_in), lambda i: (0, 0)),
            pl.BlockSpec((1, f_in), lambda i: (0, 0)),
            pl.BlockSpec((f_in, f_out), lambda i: (0, 0)),
            pl.BlockSpec((1, f_out), lambda i: (0, 0)),
        ],
        out_specs=pl.BlockSpec((tg, f_out), lambda i: (i, 0)),
        compiler_params=pltpu.CompilerParams(**compiler_kwargs),
    )(h_in, inv_p, w0, b0, w1, b1)

    return out_p[:G] if g_pad != G else out_p


def reference_forward(h_nodes, node_counts, W0, B0, W1, B1):
    """Pure-JAX reference matching the PyTorch module (mean_nodes path)."""
    outs = []
    off = 0
    for n in node_counts:
        seg = h_nodes[off:off + n]
        off += n
        m = jnp.mean(seg, axis=0)
        z = jnp.tanh(m @ W0 + B0)
        outs.append(z @ W1 + B1)
    return jnp.stack(outs, axis=0)


if __name__ == "__main__":
    # Small, deterministic problem: a batched graph of G=2 graphs with
    # 5 and 7 nodes, in_features=32, out_features=16.
    in_features, out_features = 32, 16
    node_counts = [5, 7]
    G = len(node_counts)
    # Node-slot padding chosen so max_nodes * in_features is a multiple of 128
    # (lane-dense minor dim in HBM): here 8 * 32 = 256 lanes.
    max_nodes = _round_up(max(node_counts),
                          LANE // int(np.gcd(in_features, LANE)))
    total_nodes = sum(node_counts)

    key = jax.random.PRNGKey(0)
    k_h, k_w0, k_b0, k_w1, k_b1 = jax.random.split(key, 5)

    h_nodes = jax.random.normal(k_h, (total_nodes, in_features), dtype=jnp.float32)

    # Parameters, deterministic init matching the module's 0.01 * randn(...)
    W0 = 0.01 * jax.random.normal(k_w0, (in_features, in_features), dtype=jnp.float32)
    B0 = 0.01 * jax.random.normal(k_b0, (in_features,), dtype=jnp.float32)
    W1 = 0.01 * jax.random.normal(k_w1, (in_features, out_features), dtype=jnp.float32)
    B1 = 0.01 * jax.random.normal(k_b1, (out_features,), dtype=jnp.float32)

    # Pack the batched graph directly into the kernel layout host-side:
    # [G, max_nodes * F_in], zero-padded node slots (no device-side pad copy).
    h_np = np.zeros((G, max_nodes, in_features), np.float32)
    off = 0
    for g, n in enumerate(node_counts):
        h_np[g, :n, :] = np.asarray(h_nodes[off:off + n])
        off += n
    h_flat = jnp.asarray(h_np.reshape(G, max_nodes * in_features))
    counts = jnp.asarray(node_counts, dtype=jnp.float32)

    out = aggregation_forward(h_flat, counts, W0, B0, W1, B1,
                              max_nodes=max_nodes)
    out = jax.block_until_ready(out)

    ref = reference_forward(h_nodes, node_counts, W0, B0, W1, B1)
    np.testing.assert_allclose(np.asarray(out), np.asarray(ref),
                               rtol=1e-5, atol=1e-5)

    print("KERNEL_OK")
</pallas_src>

<mosaic_0001>
module attributes {stable_mosaic.version = 11 : i64} {
  func.func @aggregation_kernel(%arg0: i32, %arg1: memref<8x256xf32, #tpu.memory_space<vmem>>, %arg2: memref<8x1xf32, #tpu.memory_space<vmem>>, %arg3: memref<32x32xf32, #tpu.memory_space<vmem>>, %arg4: memref<1x32xf32, #tpu.memory_space<vmem>>, %arg5: memref<32x16xf32, #tpu.memory_space<vmem>>, %arg6: memref<1x16xf32, #tpu.memory_space<vmem>>, %arg7: memref<8x16xf32, #tpu.memory_space<vmem>>) attributes {dimension_semantics = [#tpu.dimension_semantics<parallel>], iteration_bounds = array<i64: 1>, scalar_prefetch = 0 : i64, scratch_operands = 0 : i64, tpu.core_type = #tpu.core_type<tc>, window_params = [{transform_indices = @transform_0, window_bounds = array<i64: 8, 256>}, {transform_indices = @transform_1, window_bounds = array<i64: 8, 1>}, {pipeline_mode = #tpu.pipeline_mode<synchronous>, transform_indices = @transform_2, window_bounds = array<i64: 32, 32>}, {pipeline_mode = #tpu.pipeline_mode<synchronous>, transform_indices = @transform_3, window_bounds = array<i64: 1, 32>}, {pipeline_mode = #tpu.pipeline_mode<synchronous>, transform_indices = @transform_4, window_bounds = array<i64: 32, 16>}, {pipeline_mode = #tpu.pipeline_mode<synchronous>, transform_indices = @transform_5, window_bounds = array<i64: 1, 16>}, {transform_indices = @transform_6, window_bounds = array<i64: 8, 16>}]} {
    %c0 = arith.constant 0 : index
    %c0_0 = arith.constant 0 : index
    %0 = vector.load %arg1[%c0, %c0_0] : memref<8x256xf32, #tpu.memory_space<vmem>>, vector<8x32xf32>
    %c0_1 = arith.constant 0 : index
    %c32 = arith.constant 32 : index
    %1 = vector.load %arg1[%c0_1, %c32] : memref<8x256xf32, #tpu.memory_space<vmem>>, vector<8x32xf32>
    %2 = arith.addf %0, %1 : vector<8x32xf32>
    %c0_2 = arith.constant 0 : index
    %c64 = arith.constant 64 : index
    %3 = vector.load %arg1[%c0_2, %c64] : memref<8x256xf32, #tpu.memory_space<vmem>>, vector<8x32xf32>
    %4 = arith.addf %2, %3 : vector<8x32xf32>
    %c0_3 = arith.constant 0 : index
    %c96 = arith.constant 96 : index
    %5 = vector.load %arg1[%c0_3, %c96] : memref<8x256xf32, #tpu.memory_space<vmem>>, vector<8x32xf32>
    %6 = arith.addf %4, %5 : vector<8x32xf32>
    %c0_4 = arith.constant 0 : index
    %c128 = arith.constant 128 : index
    %7 = vector.load %arg1[%c0_4, %c128] : memref<8x256xf32, #tpu.memory_space<vmem>>, vector<8x32xf32>
    %8 = arith.addf %6, %7 : vector<8x32xf32>
    %c0_5 = arith.constant 0 : index
    %c160 = arith.constant 160 : index
    %9 = vector.load %arg1[%c0_5, %c160] : memref<8x256xf32, #tpu.memory_space<vmem>>, vector<8x32xf32>
    %10 = arith.addf %8, %9 : vector<8x32xf32>
    %c0_6 = arith.constant 0 : index
    %c192 = arith.constant 192 : index
    %11 = vector.load %arg1[%c0_6, %c192] : memref<8x256xf32, #tpu.memory_space<vmem>>, vector<8x32xf32>
    %12 = arith.addf %10, %11 : vector<8x32xf32>
    %c0_7 = arith.constant 0 : index
    %c224 = arith.constant 224 : index
    %13 = vector.load %arg1[%c0_7, %c224] : memref<8x256xf32, #tpu.memory_space<vmem>>, vector<8x32xf32>
    %14 = arith.addf %12, %13 : vector<8x32xf32>
    %c0_8 = arith.constant 0 : index
    %c0_9 = arith.constant 0 : index
    %15 = vector.load %arg3[%c0_8, %c0_9] : memref<32x32xf32, #tpu.memory_space<vmem>>, vector<32x32xf32>
    %cst = arith.constant dense<0.000000e+00> : vector<8x32xf32>
    %16 = tpu.matmul %14, %15, %cst {dimension_numbers = #tpu.dot_dimension_numbers<[1], [0], [0], [1], [0, 0, 1, 1], [], []>} : vector<8x32xf32>, vector<32x32xf32>, vector<8x32xf32> -> vector<8x32xf32>
    %c0_10 = arith.constant 0 : index
    %c0_11 = arith.constant 0 : index
    %17 = vector.load %arg2[%c0_10, %c0_11] : memref<8x1xf32, #tpu.memory_space<vmem>>, vector<8x1xf32>
    %18 = vector.broadcast %17 : vector<8x1xf32> to vector<8x32xf32>
    %19 = arith.mulf %16, %18 : vector<8x32xf32>
    %c0_12 = arith.constant 0 : index
    %c0_13 = arith.constant 0 : index
    %20 = vector.load %arg4[%c0_12, %c0_13] : memref<1x32xf32, #tpu.memory_space<vmem>>, vector<1x32xf32>
    %21 = vector.broadcast %20 : vector<1x32xf32> to vector<8x32xf32>
    %22 = arith.addf %19, %21 : vector<8x32xf32>
    %23 = math.tanh %22 : vector<8x32xf32>
    %c0_14 = arith.constant 0 : index
    %c0_15 = arith.constant 0 : index
    %24 = vector.load %arg5[%c0_14, %c0_15] : memref<32x16xf32, #tpu.memory_space<vmem>>, vector<32x16xf32>
    %cst_16 = arith.constant dense<0.000000e+00> : vector<8x16xf32>
    %25 = tpu.matmul %23, %24, %cst_16 {dimension_numbers = #tpu.dot_dimension_numbers<[1], [0], [0], [1], [0, 0, 1, 1], [], []>} : vector<8x32xf32>, vector<32x16xf32>, vector<8x16xf32> -> vector<8x16xf32>
    %c0_17 = arith.constant 0 : index
    %c0_18 = arith.constant 0 : index
    %26 = vector.load %arg6[%c0_17, %c0_18] : memref<1x16xf32, #tpu.memory_space<vmem>>, vector<1x16xf32>
    %27 = vector.broadcast %26 : vector<1x16xf32> to vector<8x16xf32>
    %28 = arith.addf %25, %27 : vector<8x16xf32>
    %c0_19 = arith.constant 0 : index
    %c0_20 = arith.constant 0 : index
    %29 = vector.load %arg7[%c0_19, %c0_20] : memref<8x16xf32, #tpu.memory_space<vmem>>, vector<8x16xf32>
    tpu.vector_store %arg7[%c0_19, %c0_20], %28 {strides = array<i32>} : memref<8x16xf32, #tpu.memory_space<vmem>>, vector<8x16xf32>,
    return
  }
  func.func @transform_0(%arg0: i32) -> (i32, i32) {
    %c0_i32 = arith.constant 0 : i32
    %c0_i32_0 = arith.constant 0 : i32
    return %arg0, %c0_i32 : i32, i32
  }
  func.func @transform_1(%arg0: i32) -> (i32, i32) {
    %c0_i32 = arith.constant 0 : i32
    %c0_i32_0 = arith.constant 0 : i32
    return %arg0, %c0_i32 : i32, i32
  }
  func.func @transform_2(%arg0: i32) -> (i32, i32) {
    %c0_i32 = arith.constant 0 : i32
    %c0_i32_0 = arith.constant 0 : i32
    %c0_i32_1 = arith.constant 0 : i32
    return %c0_i32, %c0_i32_0 : i32, i32
  }
  func.func @transform_3(%arg0: i32) -> (i32, i32) {
    %c0_i32 = arith.constant 0 : i32
    %c0_i32_0 = arith.constant 0 : i32
    %c0_i32_1 = arith.constant 0 : i32
    return %c0_i32, %c0_i32_0 : i32, i32
  }
  func.func @transform_4(%arg0: i32) -> (i32, i32) {
    %c0_i32 = arith.constant 0 : i32
    %c0_i32_0 = arith.constant 0 : i32
    %c0_i32_1 = arith.constant 0 : i32
    return %c0_i32, %c0_i32_0 : i32, i32
  }
  func.func @transform_5(%arg0: i32) -> (i32, i32) {
    %c0_i32 = arith.constant 0 : i32
    %c0_i32_0 = arith.constant 0 : i32
    %c0_i32_1 = arith.constant 0 : i32
    return %c0_i32, %c0_i32_0 : i32, i32
  }
  func.func @transform_6(%arg0: i32) -> (i32, i32) {
    %c0_i32 = arith.constant 0 : i32
    %c0_i32_0 = arith.constant 0 : i32
    return %arg0, %c0_i32 : i32, i32
  }
}

</mosaic_0001>

<llo_original>
// kernel: tpu_custom_call.1
$region0: #{tpu_custom_call.1}
  #allocation0 [shape = 'u32[]', space=smem, size = 0x4, offset = 0x4, fixed_abs, tag = 'smem constant byte address 0x4 - core index']
  #allocation1 [shape = 'u32[144,128]{1,0:T(1,128)}', space=vmem, size = 0x12000, scoped, tag = 'internal scratch']
  %s0 = inlined_call_operand.vmem [shape: f32[8,256], index: 0, kind: input, shape index: {}]
  %s1 = inlined_call_operand.vmem [shape: f32[8,1], index: 1, kind: input, shape index: {}]
  %s2 = inlined_call_operand.vmem [shape: f32[32,32], index: 2, kind: input, shape index: {}]
  %s3 = inlined_call_operand.hbm [shape: f32[1,32], index: 3, kind: input, shape index: {}]
  %s4 = inlined_call_operand.vmem [shape: f32[32,16], index: 4, kind: input, shape index: {}]
  %s5 = inlined_call_operand.vmem [shape: f32[1,16], index: 5, kind: input, shape index: {}]
  %s6 = inlined_call_operand.hbm [shape: f32[8,16], index: 6, kind: output, shape index: {}]
  %s7 = sld [smem:[#allocation0]]
  $region38: #{tpu_custom_call.1} parent=0
    _
  %s9 = ssub.s32 1, %s7
  %s10 = scalar_select 0, %s9, %s7
  $region1: #{tpu_custom_call.1} parent=0
    #allocation2 [shape = 'u8[512]{0}', space=vmem, size = 0x400, scoped, tag = 'input window, operand 3, single buffered']
    #allocation3 [shape = 's32[1]{0}', space=sflag, size = 0x4, scoped, tag = 'scoped memory for tpu_custom_call.1']
    #allocation4 [shape = 's32[1]{0}', space=sflag, size = 0x4, scoped, tag = 'scoped memory for tpu_custom_call.1']
    #allocation5 [shape = 'u8[4096]{0}', space=vmem, size = 0x1000, scoped, tag = 'output window, operand 0, single buffered']
    %11 = vsyncpa [#allocation3], 0
    %12 = vsyncpa [#allocation4], 0
    // Predicated region
    $region2: #{tpu_custom_call.1} parent=1 // pred_check
      _
    $region3: #{tpu_custom_call.1} parent=1 // pred_check_branch
      %14 = sbr.rel (0) target = $region5
    $region4: #{tpu_custom_call.1} parent=1 // pred_region
      _
    $region5: #{tpu_custom_call.1} parent=1 // pred_fallthru
      _
    // Predicated region
    $region6: #{tpu_custom_call.1} parent=1 // pred_check
      _
    $region7: #{tpu_custom_call.1} parent=1 // pred_check_branch
      %16 = sbr.rel (0) target = $region9
    $region8: #{tpu_custom_call.1} parent=1 // pred_region
      _
    $region9: #{tpu_custom_call.1} parent=1 // pred_fallthru
      _
    // Predicated region
    $region10: #{tpu_custom_call.1} parent=1 // pred_check
      _
    $region11: #{tpu_custom_call.1} parent=1 // pred_check_branch
      %18 = sbr.rel (0) target = $region13
    $region12: #{tpu_custom_call.1} parent=1 // pred_region
      _
    $region13: #{tpu_custom_call.1} parent=1 // pred_fallthru
      _
    // Predicated region
    $region14: #{tpu_custom_call.1} parent=1 // pred_check
      _
    $region15: #{tpu_custom_call.1} parent=1 // pred_check_branch
      %20 = sbr.rel (0) target = $region17
    $region16: #{tpu_custom_call.1} parent=1 // pred_region
      %s22 = ssub.s32 16, 16
      %23 = vsyncadd [#allocation3], %s22
      %s25 = sshll.u32 [#allocation2], 4
      %s26 = int_to_ptr.vmem [resolvable:$true] %s25
      %28 = dma.hbm_to_vmem [thread:$0]  %s3, 16, %s26, [#allocation3]
    $region17: #{tpu_custom_call.1} parent=1 // pred_fallthru
      _
    // Predicated region
    $region18: #{tpu_custom_call.1} parent=1 // pred_check
      _
    $region19: #{tpu_custom_call.1} parent=1 // pred_check_branch
      %30 = sbr.rel (0) target = $region21
    $region20: #{tpu_custom_call.1} parent=1 // pred_region
      _
    $region21: #{tpu_custom_call.1} parent=1 // pred_fallthru
      _
    // Predicated region
    $region22: #{tpu_custom_call.1} parent=1 // pred_check
      _
    $region23: #{tpu_custom_call.1} parent=1 // pred_check_branch
      %32 = sbr.rel (0) target = $region25
    $region24: #{tpu_custom_call.1} parent=1 // pred_region
      _
    $region25: #{tpu_custom_call.1} parent=1 // pred_fallthru
      _
    // Predicated region
    $region26: #{tpu_custom_call.1} parent=1 // pred_check
      _
    $region27: #{tpu_custom_call.1} parent=1 // pred_check_branch
      %34 = sbr.rel (0) target = $region29
    $region28: #{tpu_custom_call.1} parent=1 // pred_region
      %35 = dma.done [#allocation3], 16
    $region29: #{tpu_custom_call.1} parent=1 // pred_fallthru
      _
    %v36 = vld [vmem:[%s0] sm:$0xff]
    %38 = vrot.lane.b32.xlu0 %v36, 96
    %v39 = vpop.permute.xlu0 %38
    %v41 = vadd.f32 %v36, %v39
    %42 = vrot.lane.b32.xlu0 %v36, 64
    %v43 = vpop.permute.xlu0 %42
    %v45 = vadd.f32 %v41, %v43
    %46 = vrot.lane.b32.xlu0 %v36, 32
    %v47 = vpop.permute.xlu0 %46
    %v49 = vadd.f32 %v45, %v47
    %v50 = vld [vmem:[%s0 + $0x8] sm:$0xff]
    %v51 = vadd.f32 %v49, %v50
    %53 = vrot.lane.b32.xlu0 %v50, 96
    %v54 = vpop.permute.xlu0 %53
    %v56 = vadd.f32 %v51, %v54
    %57 = vrot.lane.b32.xlu0 %v50, 64
    %v58 = vpop.permute.xlu0 %57
    %v60 = vadd.f32 %v56, %v58
    %61 = vrot.lane.b32.xlu0 %v50, 32
    %v62 = vpop.permute.xlu0 %61
    %v64 = vadd.f32 %v60, %v62
    %v65 = vld [vmem:[%s2] sm:$0xff]
    %v66 = vld [vmem:[%s2 + $0x8] sm:$0xff]
    %v67 = vld [vmem:[%s2 + $0x10] sm:$0xff]
    %v68 = vld [vmem:[%s2 + $0x18] sm:$0xff]
    %vm69 = vcmask 261120
    %v71 = vsel %vm69, %v64, 0
    %73 = vmatprep.subr.mxu0 0.0
    %74 = vmatpush1.msra.mxu0 0.0
    %75 = vmatprep.subr.mxu0 0.0
    %76 = vmatpush1.msra.mxu0 0.0
    %77 = vmatprep.subr.mxu0 0.0
    %78 = vmatpush1.msra.mxu0 0.0
    %79 = vmatprep.subr.mxu0 0.0
    %80 = vmatpush1.msra.mxu0 0.0
    %81 = vmatprep.subr.mxu0 0.0
    %82 = vmatpush1.msra.mxu0 0.0
    %83 = vmatprep.subr.mxu0 0.0
    %84 = vmatpush1.msra.mxu0 0.0
    %85 = vmatprep.subr.mxu0 0.0
    %86 = vmatpush1.msra.mxu0 0.0
    %87 = vmatprep.subr.mxu0 0.0
    %88 = vmatpush1.msra.mxu0 0.0
    %89 = vmatprep.subr.mxu0 0.0
    %90 = vmatpush1.msra.mxu0 0.0
    %91 = vmatprep.subr.mxu0 0.0
    %92 = vmatpush1.msra.mxu0 0.0
    %93 = vmatprep.subr.mxu0 0.0
    %94 = vmatpush1.msra.mxu0 0.0
    %95 = vmatprep.subr.mxu0 0.0
    %96 = vmatpush1.msra.mxu0 0.0
    %97 = vmatprep.subr.mxu0 0.0
    %98 = vmatpush1.msra.mxu0 %v68
    %99 = vmatprep.subr.mxu0 0.0
    %100 = vmatpush1.msra.mxu0 %v67
    %101 = vmatprep.subr.mxu0 0.0
    %102 = vmatpush1.msra.mxu0 %v66
    %103 = vmatprep.subr.mxu0 0.0
    %104 = vmatpush1.msra.mxu0 %v65
    %105 = vmatprep.subr.mxu0 0.0
    %106 = vmatpush2.msra.mxu0 0.0
    %107 = vmatprep.subr.mxu0 0.0
    %108 = vmatpush2.msra.mxu0 0.0
    %109 = vmatprep.subr.mxu0 0.0
    %110 = vmatpush2.msra.mxu0 0.0
    %111 = vmatprep.subr.mxu0 0.0
    %112 = vmatpush2.msra.mxu0 0.0
    %113 = vmatprep.subr.mxu0 0.0
    %114 = vmatpush2.msra.mxu0 0.0
    %115 = vmatprep.subr.mxu0 0.0
    %116 = vmatpush2.msra.mxu0 0.0
    %117 = vmatprep.subr.mxu0 0.0
    %118 = vmatpush2.msra.mxu0 0.0
    %119 = vmatprep.subr.mxu0 0.0
    %120 = vmatpush2.msra.mxu0 0.0
    %121 = vmatprep.subr.mxu0 0.0
    %122 = vmatpush2.msra.mxu0 0.0
    %123 = vmatprep.subr.mxu0 0.0
    %124 = vmatpush2.msra.mxu0 0.0
    %125 = vmatprep.subr.mxu0 0.0
    %126 = vmatpush2.msra.mxu0 0.0
    %127 = vmatprep.subr.mxu0 0.0
    %128 = vmatpush2.msra.mxu0 0.0
    %129 = vmatprep.subr.mxu0 0.0
    %130 = vmatpush2.msra.mxu0 0.0
    %131 = vmatprep.subr.mxu0 0.0
    %132 = vmatpush2.msra.mxu0 0.0
    %133 = vmatprep.subr.mxu0 0.0
    %134 = vmatpush2.msra.mxu0 0.0
    %135 = vmatprep.subr.mxu0 0.0
    %136 = vmatpush2.msra.mxu0 0.0
    %137 = vmatprep.mubr.f32.mxu0 0.0
    %138 = vmatmul.mubr.f32.gmra.mxu0 %v71
    %v139 = vpop.f32.mrf.mxu0
    %v140 = vadd.f32 0.0, %v139
    %v141 = vpop.f32.mrf.mxu0
    %142 = vdwg.mxu0
    %v143 = vld [vmem:[%s1] sm:$0xff]
    %145 = vset.pattern.permute.xlu0 0
    %146 = vperm.xlu0 %145, %v143
    %v147 = vpop.permute.xlu0 %146
    %v149 = vmul.f32 %v140, %v147
    %v150 = vld [vmem:[#allocation2] sm:$0x1]
    %v152 = vlaneseq
    %v153 = vshrl.u32 %v152, 7
    %v154 = vsub.s32 0, %v153
    %v155 = vrot.slane %v150, %v154
    %v157 = vadd.f32 %v149, %v155
    %v158 = vtanh.pop %v157
    %v159 = vld [vmem:[%s4] sm:$0xff]
    %v160 = vld [vmem:[%s4 + $0x8] sm:$0xff]
    %v161 = vld [vmem:[%s4 + $0x10] sm:$0xff]
    %v162 = vld [vmem:[%s4 + $0x18] sm:$0xff]
    %v163 = vld [vmem:[%s5] sm:$0x1]
    %v165 = vlaneseq
    %v166 = vshrl.u32 %v165, 7
    %v167 = vsub.s32 0, %v166
    %v168 = vrot.slane %v163, %v167
    %v171 = vsel %vm69, %v158, 0
    %173 = vmatprep.subr.mxu0 0.0
    %174 = vmatpush1.msra.mxu0 0.0
    %175 = vmatprep.subr.mxu0 0.0
    %176 = vmatpush1.msra.mxu0 0.0
    %177 = vmatprep.subr.mxu0 0.0
    %178 = vmatpush1.msra.mxu0 0.0
    %179 = vmatprep.subr.mxu0 0.0
    %180 = vmatpush1.msra.mxu0 0.0
    %181 = vmatprep.subr.mxu0 0.0
    %182 = vmatpush1.msra.mxu0 0.0
    %183 = vmatprep.subr.mxu0 0.0
    %184 = vmatpush1.msra.mxu0 0.0
    %185 = vmatprep.subr.mxu0 0.0
    %186 = vmatpush1.msra.mxu0 0.0
    %187 = vmatprep.subr.mxu0 0.0
    %188 = vmatpush1.msra.mxu0 0.0
    %189 = vmatprep.subr.mxu0 0.0
    %190 = vmatpush1.msra.mxu0 0.0
    %191 = vmatprep.subr.mxu0 0.0
    %192 = vmatpush1.msra.mxu0 0.0
    %193 = vmatprep.subr.mxu0 0.0
    %194 = vmatpush1.msra.mxu0 0.0
    %195 = vmatprep.subr.mxu0 0.0
    %196 = vmatpush1.msra.mxu0 0.0
    %197 = vmatprep.subr.mxu0 0.0
    %198 = vmatpush1.msra.mxu0 %v162
    %199 = vmatprep.subr.mxu0 0.0
    %200 = vmatpush1.msra.mxu0 %v161
    %201 = vmatprep.subr.mxu0 0.0
    %202 = vmatpush1.msra.mxu0 %v160
    %203 = vmatprep.subr.mxu0 0.0
    %204 = vmatpush1.msra.mxu0 %v159
    %205 = vmatprep.subr.mxu0 0.0
    %206 = vmatpush2.msra.mxu0 0.0
    %207 = vmatprep.subr.mxu0 0.0
    %208 = vmatpush2.msra.mxu0 0.0
    %209 = vmatprep.subr.mxu0 0.0
    %210 = vmatpush2.msra.mxu0 0.0
    %211 = vmatprep.subr.mxu0 0.0
    %212 = vmatpush2.msra.mxu0 0.0
    %213 = vmatprep.subr.mxu0 0.0
    %214 = vmatpush2.msra.mxu0 0.0
    %215 = vmatprep.subr.mxu0 0.0
    %216 = vmatpush2.msra.mxu0 0.0
    %217 = vmatprep.subr.mxu0 0.0
    %218 = vmatpush2.msra.mxu0 0.0
    %219 = vmatprep.subr.mxu0 0.0
    %220 = vmatpush2.msra.mxu0 0.0
    %221 = vmatprep.subr.mxu0 0.0
    %222 = vmatpush2.msra.mxu0 0.0
    %223 = vmatprep.subr.mxu0 0.0
    %224 = vmatpush2.msra.mxu0 0.0
    %225 = vmatprep.subr.mxu0 0.0
    %226 = vmatpush2.msra.mxu0 0.0
    %227 = vmatprep.subr.mxu0 0.0
    %228 = vmatpush2.msra.mxu0 0.0
    %229 = vmatprep.subr.mxu0 0.0
    %230 = vmatpush2.msra.mxu0 0.0
    %231 = vmatprep.subr.mxu0 0.0
    %232 = vmatpush2.msra.mxu0 0.0
    %233 = vmatprep.subr.mxu0 0.0
    %234 = vmatpush2.msra.mxu0 0.0
    %235 = vmatprep.subr.mxu0 0.0
    %236 = vmatpush2.msra.mxu0 0.0
    %237 = vmatprep.mubr.f32.mxu0 0.0
    %238 = vmatmul.mubr.f32.gmra.mxu0 %v171
    %v239 = vpop.f32.mrf.mxu0
    %v240 = vadd.f32 %v168, %v239
    %v241 = vpop.f32.mrf.mxu0
    %242 = vdwg.mxu0
    %vm243 = vcmask 130048
    %244 = vst.msk [vmem:[#allocation5] sm:$0xff] %vm243, %v240
    // Predicated region
    $region30: #{tpu_custom_call.1} parent=1 // pred_check
      _
    $region31: #{tpu_custom_call.1} parent=1 // pred_check_branch
      %246 = sbr.rel (0) target = $region33
    $region32: #{tpu_custom_call.1} parent=1 // pred_region
      %s248 = ssub.s32 128, 128
      %249 = vsyncadd [#allocation4], %s248
      %s251 = sshll.u32 [#allocation5], 4
      %s252 = int_to_ptr.vmem [resolvable:$true] %s251
      %254 = dma.vmem_to_hbm [thread:$0]  %s252, 128, %s6, [#allocation4]
    $region33: #{tpu_custom_call.1} parent=1 // pred_fallthru
      _
    // Predicated region
    $region34: #{tpu_custom_call.1} parent=1 // pred_check
      _
    $region35: #{tpu_custom_call.1} parent=1 // pred_check_branch
      %256 = sbr.rel (0) target = $region37
    $region36: #{tpu_custom_call.1} parent=1 // pred_region
      %257 = dma.done [#allocation4], 128
    $region37: #{tpu_custom_call.1} parent=1 // pred_fallthru
      _
    %258 = vsyncpa [#allocation3], 1
    %259 = vsyncpa [#allocation4], 1

</llo_original>
